<compile_context>
chip_gen: v6e
topology: v6e:2x2x1
jax: 0.10.0
libtpu: 0.0.40
codegen_flags: <defaults>
</compile_context>

<pallas_src>
import math

import jax
import jax.numpy as jnp
from jax.experimental import pallas as pl
from jax.experimental.pallas import tpu as pltpu

_LANE = 128                     # vreg lane width
_BLOCK_BUDGET_BYTES = 1 << 20   # ~1 MiB per x/out tile


def _sublane(dtype) -> int:
    """Minimum second-to-last tile multiple for a dtype (packing-aware)."""
    itemsize = jnp.dtype(dtype).itemsize
    return {4: 8, 2: 16, 1: 32}.get(itemsize, 8)


def _build_pe_table(embed_dim: int, max_len: int = 1000,
                    dtype=jnp.float32) -> jnp.ndarray:
    """Deterministic sinusoidal table, identical to the PyTorch __init__ (odd-E safe)."""
    position = jnp.arange(0, max_len, dtype=jnp.float32)[:, None]          # [L, 1]
    div_term = jnp.exp(
        jnp.arange(0, embed_dim, 2, dtype=jnp.float32)
        * (-math.log(10000.0) / embed_dim)
    )                                                                       # [ceil(E/2)]
    angles = position * div_term                                            # [L, ceil(E/2)]
    pe = jnp.zeros((max_len, embed_dim), dtype=jnp.float32)
    pe = pe.at[:, 0::2].set(jnp.sin(angles))
    pe = pe.at[:, 1::2].set(jnp.cos(angles[:, : embed_dim // 2]))           # odd-E guard
    return pe.astype(dtype)


# -----------------------------------------------------------------------------
# Kernels — pure broadcast elementwise add
# -----------------------------------------------------------------------------
def _add_pe_2d_kernel(x_ref, pe_ref, o_ref):
    # x_ref/o_ref: (TB, TN); pe_ref: (1, TN) broadcasts over the batch rows.
    o_ref[...] = x_ref[...] + pe_ref[...]


def _add_pe_3d_kernel(x_ref, pe_ref, o_ref):
    # x_ref/o_ref: (1, TS, E); pe_ref: (TS, E)
    o_ref[...] = x_ref[...] + pe_ref[...][None, :, :]


# -----------------------------------------------------------------------------
# Wrapper
# -----------------------------------------------------------------------------
def sinusoidal_positional_encoding(x: jnp.ndarray, pe_table: jnp.ndarray) -> jnp.ndarray:
    """x: [B, S, E]; pe_table: [max_len, E] -> x + pe[:S] broadcast over batch."""
    b, s, e = x.shape
    max_len = pe_table.shape[0]
    if s > max_len:
        raise ValueError(f"seq_len={s} exceeds max_len={max_len} of the pe table")
    if pe_table.shape[1] != e:
        raise ValueError("embed_dim mismatch between x and pe_table")

    pe = pe_table[:s, :].astype(x.dtype)                    # [S, E], same dtype as x
    itemsize = jnp.dtype(x.dtype).itemsize
    sub = _sublane(x.dtype)
    n = s * e

    if n % _LANE == 0:
        # ---- lane-dense path: flatten each (S, E) slab into one row of length n.
        x2 = x.reshape(b, n)
        pe2 = pe.reshape(1, n)

        tb = b if b <= sub else sub                          # full batch or sublane multiple
        tn = min(n, max(_LANE,
                        (_BLOCK_BUDGET_BYTES // (tb * itemsize)) // _LANE * _LANE))
        grid = (pl.cdiv(n, tn), pl.cdiv(b, tb))              # batch innermost -> pe resident

        out2 = pl.pallas_call(
            _add_pe_2d_kernel,
            out_shape=jax.ShapeDtypeStruct((b, n), x.dtype),
            grid_spec=pltpu.PrefetchScalarGridSpec(
                num_scalar_prefetch=0,
                grid=grid,
                in_specs=[
                    pl.BlockSpec((tb, tn), lambda ni, bi: (bi, ni)),
                    pl.BlockSpec((1, tn), lambda ni, bi: (0, ni)),   # constant over bi
                ],
                out_specs=pl.BlockSpec((tb, tn), lambda ni, bi: (bi, ni)),
            ),
            compiler_params=pltpu.CompilerParams(
                dimension_semantics=("parallel", "parallel"),
            ),
        )(x2, pe2)
        return out2.reshape(b, s, e)

    # ---- fallback path (S*E not lane aligned): keep (S, E) layout, tile S.
    if s <= sub:
        ts = s
    else:
        ts = min(s, max(sub, (_BLOCK_BUDGET_BYTES // (e * itemsize)) // sub * sub))
    grid = (pl.cdiv(s, ts), b)                               # batch innermost -> pe resident

    return pl.pallas_call(
        _add_pe_3d_kernel,
        out_shape=jax.ShapeDtypeStruct((b, s, e), x.dtype),
        grid_spec=pltpu.PrefetchScalarGridSpec(
            num_scalar_prefetch=0,
            grid=grid,
            in_specs=[
                pl.BlockSpec((1, ts, e), lambda si, bi: (bi, si, 0)),
                pl.BlockSpec((ts, e), lambda si, bi: (si, 0)),       # constant over bi
            ],
            out_specs=pl.BlockSpec((1, ts, e), lambda si, bi: (bi, si, 0)),
        ),
        compiler_params=pltpu.CompilerParams(
            dimension_semantics=("parallel", "parallel"),
        ),
    )(x, pe)


if __name__ == "__main__":
    key = jax.random.PRNGKey(0)
    k0, k1 = jax.random.split(key)

    # Primary test: lane-dense path (S*E = 256, a multiple of 128).
    batch, seq_len, embed_dim, max_len = 2, 8, 32, 1000
    pe_table = _build_pe_table(embed_dim, max_len)
    x = jax.random.normal(k0, (batch, seq_len, embed_dim), dtype=jnp.float32)
    ref = x + pe_table[None, :seq_len, :]                    # pure-JAX reference
    out = jax.block_until_ready(sinusoidal_positional_encoding(x, pe_table))
    assert out.shape == (batch, seq_len, embed_dim)
    assert jnp.allclose(out, ref, atol=1e-6), "mismatch vs reference (lane-dense path)"

    # Secondary test: fallback path (odd embed_dim, S*E not a multiple of 128).
    embed_odd = 33
    pe_table_odd = _build_pe_table(embed_odd, max_len)
    x_odd = jax.random.normal(k1, (batch, seq_len, embed_odd), dtype=jnp.float32)
    ref_odd = x_odd + pe_table_odd[None, :seq_len, :]
    out_odd = jax.block_until_ready(sinusoidal_positional_encoding(x_odd, pe_table_odd))
    assert jnp.allclose(out_odd, ref_odd, atol=1e-6), "mismatch vs reference (fallback path)"

    print("KERNEL_OK")
</pallas_src>

<mosaic_0001>
module attributes {stable_mosaic.version = 11 : i64} {
  func.func @_add_pe_2d_kernel(%arg0: i32, %arg1: i32, %arg2: memref<2x256xf32, #tpu.memory_space<vmem>>, %arg3: memref<1x256xf32, #tpu.memory_space<vmem>>, %arg4: memref<2x256xf32, #tpu.memory_space<vmem>>) attributes {dimension_semantics = [#tpu.dimension_semantics<parallel>, #tpu.dimension_semantics<parallel>], iteration_bounds = array<i64: 1, 1>, scalar_prefetch = 0 : i64, scratch_operands = 0 : i64, tpu.core_type = #tpu.core_type<tc>, window_params = [{transform_indices = @transform_0, window_bounds = array<i64: 2, 256>}, {transform_indices = @transform_1, window_bounds = array<i64: 1, 256>}, {transform_indices = @transform_2, window_bounds = array<i64: 2, 256>}]} {
    %c0 = arith.constant 0 : index
    %c0_0 = arith.constant 0 : index
    %0 = vector.load %arg2[%c0, %c0_0] : memref<2x256xf32, #tpu.memory_space<vmem>>, vector<2x256xf32>
    %c0_1 = arith.constant 0 : index
    %c0_2 = arith.constant 0 : index
    %1 = vector.load %arg3[%c0_1, %c0_2] : memref<1x256xf32, #tpu.memory_space<vmem>>, vector<1x256xf32>
    %2 = vector.broadcast %1 : vector<1x256xf32> to vector<2x256xf32>
    %3 = arith.addf %0, %2 : vector<2x256xf32>
    %c0_3 = arith.constant 0 : index
    %c0_4 = arith.constant 0 : index
    %4 = vector.load %arg4[%c0_3, %c0_4] : memref<2x256xf32, #tpu.memory_space<vmem>>, vector<2x256xf32>
    tpu.vector_store %arg4[%c0_3, %c0_4], %3 {strides = array<i32>} : memref<2x256xf32, #tpu.memory_space<vmem>>, vector<2x256xf32>,
    return
  }
  func.func @transform_0(%arg0: i32, %arg1: i32) -> (i32, i32) {
    %c0_i32 = arith.constant 0 : i32
    return %arg1, %arg0 : i32, i32
  }
  func.func @transform_1(%arg0: i32, %arg1: i32) -> (i32, i32) {
    %c0_i32 = arith.constant 0 : i32
    %c0_i32_0 = arith.constant 0 : i32
    return %c0_i32, %arg0 : i32, i32
  }
  func.func @transform_2(%arg0: i32, %arg1: i32) -> (i32, i32) {
    %c0_i32 = arith.constant 0 : i32
    return %arg1, %arg0 : i32, i32
  }
}

</mosaic_0001>

<llo_original>
// kernel: tpu_custom_call.1
$region0: #{tpu_custom_call.1}
  #allocation0 [shape = 'u32[]', space=smem, size = 0x4, offset = 0x4, fixed_abs, tag = 'smem constant byte address 0x4 - core index']
  #allocation1 [shape = 'u32[144,128]{1,0:T(1,128)}', space=vmem, size = 0x12000, scoped, tag = 'internal scratch']
  %s0 = inlined_call_operand.hbm [shape: f32[2,256], index: 0, kind: input, shape index: {}]
  %s1 = inlined_call_operand.hbm [shape: f32[1,256], index: 1, kind: input, shape index: {}]
  %s2 = inlined_call_operand.hbm [shape: f32[2,256], index: 2, kind: output, shape index: {}]
  %s3 = sld [smem:[#allocation0]]
  $region26: #{tpu_custom_call.1} parent=0
    _
  %s5 = ssub.s32 1, %s3
  %s6 = scalar_select 0, %s5, %s3
  $region1: #{tpu_custom_call.1} parent=0
    #allocation2 [shape = 'u8[2048]{0}', space=vmem, size = 0x800, scoped, tag = 'input window, operand 0, single buffered']
    #allocation3 [shape = 's32[1]{0}', space=sflag, size = 0x4, scoped, tag = 'scoped memory for tpu_custom_call.1']
    #allocation4 [shape = 's32[1]{0}', space=sflag, size = 0x4, scoped, tag = 'scoped memory for tpu_custom_call.1']
    #allocation5 [shape = 'u8[1024]{0}', space=vmem, size = 0x400, scoped, tag = 'input window, operand 1, single buffered']
    #allocation6 [shape = 's32[1]{0}', space=sflag, size = 0x4, scoped, tag = 'scoped memory for tpu_custom_call.1']
    #allocation7 [shape = 'u8[2048]{0}', space=vmem, size = 0x800, scoped, tag = 'output window, operand 0, single buffered']
    %7 = vsyncpa [#allocation3], 0
    %8 = vsyncpa [#allocation6], 0
    %9 = vsyncpa [#allocation4], 0
    // Predicated region
    $region2: #{tpu_custom_call.1} parent=1 // pred_check
      _
    $region3: #{tpu_custom_call.1} parent=1 // pred_check_branch
      %11 = sbr.rel (0) target = $region5
    $region4: #{tpu_custom_call.1} parent=1 // pred_region
      %s13 = ssub.s32 64, 64
      %14 = vsyncadd [#allocation3], %s13
      %s16 = sshll.u32 [#allocation2], 4
      %s17 = int_to_ptr.vmem [resolvable:$true] %s16
      %19 = dma.hbm_to_vmem [thread:$0]  %s0, 64, %s17, [#allocation3]
    $region5: #{tpu_custom_call.1} parent=1 // pred_fallthru
      _
    // Predicated region
    $region6: #{tpu_custom_call.1} parent=1 // pred_check
      _
    $region7: #{tpu_custom_call.1} parent=1 // pred_check_branch
      %21 = sbr.rel (0) target = $region9
    $region8: #{tpu_custom_call.1} parent=1 // pred_region
      %s23 = ssub.s32 32, 32
      %24 = vsyncadd [#allocation6], %s23
      %s26 = sshll.u32 [#allocation5], 4
      %s27 = int_to_ptr.vmem [resolvable:$true] %s26
      %29 = dma.hbm_to_vmem [thread:$0]  %s1, 32, %s27, [#allocation6]
    $region9: #{tpu_custom_call.1} parent=1 // pred_fallthru
      _
    // Predicated region
    $region10: #{tpu_custom_call.1} parent=1 // pred_check
      _
    $region11: #{tpu_custom_call.1} parent=1 // pred_check_branch
      %31 = sbr.rel (0) target = $region13
    $region12: #{tpu_custom_call.1} parent=1 // pred_region
      %32 = dma.done [#allocation3], 64
    $region13: #{tpu_custom_call.1} parent=1 // pred_fallthru
      _
    // Predicated region
    $region14: #{tpu_custom_call.1} parent=1 // pred_check
      _
    $region15: #{tpu_custom_call.1} parent=1 // pred_check_branch
      %34 = sbr.rel (0) target = $region17
    $region16: #{tpu_custom_call.1} parent=1 // pred_region
      %35 = dma.done [#allocation6], 32
    $region17: #{tpu_custom_call.1} parent=1 // pred_fallthru
      _
    %v36 = vld [vmem:[#allocation2] sm:$0xf]
    %v37 = vld [vmem:[#allocation5] sm:$0x3]
    %v39 = vlaneseq
    %v40 = vshrl.u32 %v39, 7
    %v41 = vsub.s32 0, %v40
    %v42 = vrot.slane %v37, %v41
    %v43 = vlaneseq
    %v44 = vshrl.u32 %v43, 7
    %v45 = vsub.s32 1, %v44
    %v46 = vrot.slane %v37, %v45
    %v47 = vcombine.low %v42, %v46
    %v49 = vunpack.c.l.s4 1983009808
    %v50 = vunpack.c.0.s8 %v49
    %v51 = vlaneseq
    %v52 = vshrl.u32 %v51, 7
    %v53 = vsub.s32 %v50, %v52
    %v54 = vrot.slane %v47, %v53
    %v56 = vadd.f32 %v36, %v54
    %57 = vst [vmem:[#allocation7] sm:$0xf] %v56
    // Predicated region
    $region18: #{tpu_custom_call.1} parent=1 // pred_check
      _
    $region19: #{tpu_custom_call.1} parent=1 // pred_check_branch
      %59 = sbr.rel (0) target = $region21
    $region20: #{tpu_custom_call.1} parent=1 // pred_region
      %s61 = ssub.s32 64, 64
      %62 = vsyncadd [#allocation4], %s61
      %s64 = sshll.u32 [#allocation7], 4
      %s65 = int_to_ptr.vmem [resolvable:$true] %s64
      %67 = dma.vmem_to_hbm [thread:$0]  %s65, 64, %s2, [#allocation4]
    $region21: #{tpu_custom_call.1} parent=1 // pred_fallthru
      _
    // Predicated region
    $region22: #{tpu_custom_call.1} parent=1 // pred_check
      _
    $region23: #{tpu_custom_call.1} parent=1 // pred_check_branch
      %69 = sbr.rel (0) target = $region25
    $region24: #{tpu_custom_call.1} parent=1 // pred_region
      %70 = dma.done [#allocation4], 64
    $region25: #{tpu_custom_call.1} parent=1 // pred_fallthru
      _
    %71 = vsyncpa [#allocation3], 1
    %72 = vsyncpa [#allocation6], 1
    %73 = vsyncpa [#allocation4], 1

</llo_original>
